<compile_context>
chip_gen: v6e
topology: v6e:2x2x1
jax: 0.10.0
libtpu: 0.0.40
codegen_flags: <defaults>
</compile_context>

<pallas_src>
import jax
import jax.numpy as jnp
import numpy as np
from jax.experimental import pallas as pl
from jax.experimental.pallas import tpu as pltpu  # noqa: F401  (TPU backend)


def _identity_kernel(x_ref, o_ref):
    # x_ref and o_ref alias the same HBM buffer (input_output_aliases={0: 0})
    # and live in memory_space=pl.ANY, so the buffer already holds the result.
    # Nothing to read, compute, or write.
    del x_ref, o_ref


@jax.jit
def identity(x: jax.Array) -> jax.Array:
    """Identity forward pass: returns a tensor equal to `x` (any shape/dtype)."""
    if x.ndim == 0 or x.size == 0:
        # Degenerate inputs: nothing for a kernel to do.
        return x

    return pl.pallas_call(
        _identity_kernel,
        out_shape=jax.ShapeDtypeStruct(x.shape, x.dtype),
        in_specs=[pl.BlockSpec(memory_space=pl.ANY)],   # raw HBM ref, no auto-DMA
        out_specs=pl.BlockSpec(memory_space=pl.ANY),    # aliased HBM ref, no auto-DMA
        input_output_aliases={0: 0},                    # output buffer == input buffer
    )(x)


if __name__ == "__main__":
    key = jax.random.PRNGKey(0)

    # Primary test: the NCHW-ish shape the surrounding model would feed.
    N, C, H, W = 2, 4, 16, 16
    x = jax.random.normal(key, (N, C, H, W), dtype=jnp.float32)
    y = jax.block_until_ready(identity(x))
    assert y.shape == x.shape and y.dtype == x.dtype
    np.testing.assert_array_equal(np.asarray(y), np.asarray(x))

    # Ragged / non-(8,128)-aligned shape and a packed dtype: still exact,
    # since nothing is padded, copied, or re-laid-out.
    x2 = jax.random.normal(jax.random.PRNGKey(1), (3, 5, 7), dtype=jnp.bfloat16)
    y2 = jax.block_until_ready(identity(x2))
    assert y2.shape == x2.shape and y2.dtype == x2.dtype
    np.testing.assert_array_equal(np.asarray(y2), np.asarray(x2))

    print("KERNEL_OK")
</pallas_src>

<mosaic_0001>
module attributes {stable_mosaic.version = 11 : i64} {
  func.func @_identity_kernel(%arg0: memref<2x4x16x16xf32, #tpu.memory_space<any>>, %arg1: memref<2x4x16x16xf32, #tpu.memory_space<any>>) attributes {dimension_semantics = [], scalar_prefetch = 0 : i64, scratch_operands = 0 : i64, tpu.core_type = #tpu.core_type<tc>} {
    return
  }
}

</mosaic_0001>

<llo_original>
// kernel: identity.1
$region0: #{identity.1}
  #allocation0 [shape = 'u32[]', space=smem, size = 0x4, offset = 0x4, fixed_abs, tag = 'smem constant byte address 0x4 - core index']
  #allocation1 [shape = 'u32[144,128]{1,0:T(1,128)}', space=vmem, size = 0x12000, scoped, tag = 'internal scratch']
  %s0 = inlined_call_operand.hbm [shape: f32[2,4,16,16], index: 0, kind: input, shape index: {}, may-alias: {0,1}]
  %s1 = inlined_call_operand.hbm [shape: f32[2,4,16,16], index: 1, kind: output, shape index: {}, may-alias: {0,1}]
  %s2 = sld [smem:[#allocation0]]
  $region2: #{identity.1} parent=0
    _
  %s4 = ssub.s32 1, %s2
  %s5 = scalar_select 0, %s4, %s2

</llo_original>
